<compile_context>
chip_gen: v6e
topology: v6e:2x2x1
jax: 0.10.0
libtpu: 0.0.40
codegen_flags: <defaults>
</compile_context>

<pallas_src>
import numpy as np

import jax
import jax.numpy as jnp
from jax.experimental import pallas as pl
from jax.experimental.pallas import tpu as pltpu


# ----------------------------------------------------------------------------
# Smoke-test kernel (not part of the model's forward path).
# ----------------------------------------------------------------------------
_SLAB = (1024, 1024)   # f32 -> 4 MiB total
_TILE = (512, 512)     # 1 MiB per block; lane dim = 4*128 (unmasked vst)


def _scale_bias_kernel(x_ref, o_ref):
    # Non-identity VPU op: falsifiable even with an aliased output buffer.
    o_ref[...] = x_ref[...] * 2.0 + 1.0


def _pallas_scale_bias(x2d: jax.Array) -> jax.Array:
    """Gridded, lane-dense Pallas pipeline check: y = 2*x + 1.

    The output aliases the (donated) input HBM buffer, so no extra output
    allocation is made; data movement (HBM->VMEM->HBM) is kept — that is the
    whole point of the pipeline check.
    """
    gm = _SLAB[0] // _TILE[0]
    gn = _SLAB[1] // _TILE[1]
    return pl.pallas_call(
        _scale_bias_kernel,
        out_shape=jax.ShapeDtypeStruct(x2d.shape, x2d.dtype),
        grid_spec=pltpu.PrefetchScalarGridSpec(
            num_scalar_prefetch=0,
            grid=(gm, gn),
            in_specs=[pl.BlockSpec(_TILE, lambda i, j: (i, j))],
            out_specs=pl.BlockSpec(_TILE, lambda i, j: (i, j)),
        ),
        compiler_params=pltpu.CompilerParams(
            dimension_semantics=("parallel", "parallel"),
        ),
        input_output_aliases={0: 0},
    )(x2d)


# Donate the input so the alias declared in pallas_call is actually usable
# (no defensive copy) — the smoke-test slab is never needed afterwards.
_pallas_scale_bias_donated = jax.jit(_pallas_scale_bias, donate_argnums=(0,))


# ----------------------------------------------------------------------------
# Model port (exact forward semantics of the PyTorch module).
# ----------------------------------------------------------------------------
class NetworkSample:
    """JAX port of the (empty) PyTorch NetworkSample module."""

    def __init__(self, DA: bool = False):
        # Original __init__ declares no parameters.
        self.DA = DA

    def forward(self, x: jax.Array):
        # Exact semantics of the PyTorch module: forward(x) -> None.
        return None

    def __call__(self, x: jax.Array):
        return self.forward(x)


if __name__ == "__main__":
    key = jax.random.PRNGKey(0)
    k_model, k_slab = jax.random.split(key)

    # ---- Pallas pipeline smoke test (harness only, not model forward) ------
    x2d = jax.random.normal(k_slab, _SLAB, dtype=jnp.float32)

    # Materialize the reference on HOST before the donated call, so it cannot
    # alias the in-place-updated device buffer.
    expected = np.asarray(x2d) * 2.0 + 1.0

    y2d = _pallas_scale_bias_donated(x2d)
    jax.block_until_ready(y2d)
    np.testing.assert_allclose(np.asarray(y2d), expected, rtol=1e-6, atol=1e-6)

    # ---- Model forward: small NCHW input, returns None (matches PyTorch) ---
    x = jax.random.normal(k_model, (2, 4, 16, 16), dtype=jnp.float32)
    model = NetworkSample()
    out = model(x)
    assert out is None

    print("KERNEL_OK")
</pallas_src>

<mosaic_0001>
module attributes {stable_mosaic.version = 11 : i64} {
  func.func @_scale_bias_kernel(%arg0: i32, %arg1: i32, %arg2: memref<512x512xf32, #tpu.memory_space<vmem>>, %arg3: memref<512x512xf32, #tpu.memory_space<vmem>>) attributes {dimension_semantics = [#tpu.dimension_semantics<parallel>, #tpu.dimension_semantics<parallel>], iteration_bounds = array<i64: 2, 2>, scalar_prefetch = 0 : i64, scratch_operands = 0 : i64, tpu.core_type = #tpu.core_type<tc>, window_params = [{transform_indices = @transform_0, window_bounds = array<i64: 512, 512>}, {transform_indices = @transform_1, window_bounds = array<i64: 512, 512>}]} {
    %c0 = arith.constant 0 : index
    %c0_0 = arith.constant 0 : index
    %0 = vector.load %arg2[%c0, %c0_0] : memref<512x512xf32, #tpu.memory_space<vmem>>, vector<512x512xf32>
    %cst = arith.constant 2.000000e+00 : f32
    %1 = vector.broadcast %cst : f32 to vector<512x512xf32>
    %2 = arith.mulf %0, %1 : vector<512x512xf32>
    %cst_1 = arith.constant 1.000000e+00 : f32
    %3 = vector.broadcast %cst_1 : f32 to vector<512x512xf32>
    %4 = arith.addf %2, %3 : vector<512x512xf32>
    %c0_2 = arith.constant 0 : index
    %c0_3 = arith.constant 0 : index
    %5 = vector.load %arg3[%c0_2, %c0_3] : memref<512x512xf32, #tpu.memory_space<vmem>>, vector<512x512xf32>
    tpu.vector_store %arg3[%c0_2, %c0_3], %4 {strides = array<i32>} : memref<512x512xf32, #tpu.memory_space<vmem>>, vector<512x512xf32>,
    return
  }
  func.func @transform_0(%arg0: i32, %arg1: i32) -> (i32, i32) {
    %c0_i32 = arith.constant 0 : i32
    return %arg0, %arg1 : i32, i32
  }
  func.func @transform_1(%arg0: i32, %arg1: i32) -> (i32, i32) {
    %c0_i32 = arith.constant 0 : i32
    return %arg0, %arg1 : i32, i32
  }
}

</mosaic_0001>

<llo_original>
// kernel: _pallas_scale_bias.1
$region0: #{_pallas_scale_bias.1}
  #allocation0 [shape = 'u32[]', space=smem, size = 0x4, offset = 0x4, fixed_abs, tag = 'smem constant byte address 0x4 - core index']
  #allocation1 [shape = 'u32[144,128]{1,0:T(1,128)}', space=vmem, size = 0x12000, scoped, tag = 'internal scratch']
  %s0 = inlined_call_operand.hbm [shape: f32[1024,1024], index: 0, kind: input, shape index: {}, may-alias: {0,1}]
  %s1 = inlined_call_operand.hbm [shape: f32[1024,1024], index: 1, kind: output, shape index: {}, may-alias: {0,1}]
  %s2 = sld [smem:[#allocation0]]
  $region41: #{_pallas_scale_bias.1} parent=0
    _
  %s4 = ssub.s32 1, %s2
  %s5 = scalar_select 0, %s4, %s2
  $region1: #{_pallas_scale_bias.1} parent=0
    #allocation2 [shape = 'u8[2097152]{0}', space=vmem, size = 0x200000, scoped, tag = 'input window, operand 0']
    #allocation3 [shape = 's32[2]{0}', space=sflag, size = 0x8, scoped, tag = 'scoped memory for _pallas_scale_bias.1']
    #allocation4 [shape = 's32[2]{0}', space=sflag, size = 0x8, scoped, tag = 'scoped memory for _pallas_scale_bias.1']
    #allocation5 [shape = 'u8[2097152]{0}', space=vmem, size = 0x200000, scoped, tag = 'output window, operand 0']
    %6 = vsyncpa [#allocation3], 0
    %s7 = scalar_lea.sflag [#allocation3], 1
    %8 = vsyncpa %s7, 0
    %9 = vsyncpa [#allocation4], 0
    %s10 = scalar_lea.sflag [#allocation4], 1
    %11 = vsyncpa %s10, 0
    loop: start=0, step=1, limit=6
    $region2: #{_pallas_scale_bias.1} parent=1 // loop_pre_header
      _
    $region3: #{_pallas_scale_bias.1} parent=1 // loop_header
      %s13 = sphi 0, %s17
      %p14 = scmp.ge.s32.totalorder %s13, 6
      %s20 = sphi 0, %s32
      %s21 = sphi 0, %s28
      %s22 = sphi 0, %s20
      %s23 = sphi 0, %s21
      %s24 = sphi 0, %s22
      %s25 = sphi 0, %s23
      %s37 = sphi 0, %s39
      %s40 = sphi 0, %s37
      %s41 = sphi 0, %s40
      %s57 = sphi 0, %s41
      %s65 = sphi 0, %s67
      %s68 = sphi 0, %s65
      %s69 = sphi 0, %s68
      %s85 = sphi 0, %s69
    $region4: #{_pallas_scale_bias.1} parent=1 // loop_header_branch
      %16 = sbr.rel (%p14) target = $region8
    $region5: #{_pallas_scale_bias.1} parent=1 // loop_body
      %s18 = ssub.s32 %s13, 1
      %s19 = ssub.s32 %s13, 2
      %s26 = sadd.s32 1, %s21
      %p27 = scmp.ge.s32.totalorder %s26, 2
      %s28 = scalar_select %p27, 0, %s26
      %s29 = sadd.s32 1, %s20
      %s30 = scalar_select %p27, %s29, %s20
      %p31 = scmp.ge.s32.totalorder %s30, 2
      %s32 = scalar_select %p31, 0, %s30
      %s33 = ssub.s32 %s20, %s32
      %s34 = ssub.s32 %s21, %s28
      %s35 = sor.u32 %s33, %s34
      %p36 = scmp.eq.s32.totalorder %s35, 0
      %s38 = sadd.s32 %s37, 1
      %s39 = scalar_select %p36, %s37, %s38
      %p42 = pneg %p36
      %p43 = scmp.eq.s32.totalorder %s13, 3
      %p44 = por %p42, %p43
      %p45 = scmp.ne.s32.totalorder %s37, %s40
      %p46 = scmp.eq.s32.totalorder %s13, 0
      %p47 = por %p45, %p46
      %p48 = scmp.ne.s32.totalorder %s37, %s40
      %p49 = scmp.eq.s32.totalorder %s18, 3
      %p50 = por %p48, %p49
      %p51 = scmp.ne.s32.totalorder %s40, %s41
      %p52 = scmp.eq.s32.totalorder %s18, 0
      %p53 = por %p51, %p52
      %p54 = scmp.ne.s32.totalorder %s40, %s41
      %p55 = scmp.eq.s32.totalorder %s19, 3
      %p56 = por %p54, %p55
      %p58 = scmp.ne.s32.totalorder %s41, %s57
      %p59 = scmp.eq.s32.totalorder %s19, 0
      %p60 = por %p58, %p59
      %s61 = ssub.s32 %s20, %s32
      %s62 = ssub.s32 %s21, %s28
      %s63 = sor.u32 %s61, %s62
      %p64 = scmp.eq.s32.totalorder %s63, 0
      %s66 = sadd.s32 %s65, 1
      %s67 = scalar_select %p64, %s65, %s66
      %p70 = pneg %p64
      %p71 = scmp.eq.s32.totalorder %s13, 3
      %p72 = por %p70, %p71
      %p73 = scmp.ne.s32.totalorder %s65, %s68
      %p74 = scmp.eq.s32.totalorder %s13, 0
      %p75 = por %p73, %p74
      %p76 = scmp.ne.s32.totalorder %s65, %s68
      %p77 = scmp.eq.s32.totalorder %s18, 3
      %p78 = por %p76, %p77
      %p79 = scmp.ne.s32.totalorder %s68, %s69
      %p80 = scmp.eq.s32.totalorder %s18, 0
      %p81 = por %p79, %p80
      %p82 = scmp.ne.s32.totalorder %s68, %s69
      %p83 = scmp.eq.s32.totalorder %s19, 3
      %p84 = por %p82, %p83
      %p86 = scmp.ne.s32.totalorder %s69, %s85
      %p87 = scmp.eq.s32.totalorder %s19, 0
      %p88 = por %p86, %p87
      %p89 = scmp.le.s32.totalorder 1, %s13
      %p90 = scmp.lt.s32.totalorder %s13, 5
      %p91 = pnand %p89, %p90
      %p92 = pneg %p91
      // Predicated region
      $region9: #{_pallas_scale_bias.1} parent=5 // pred_check
        _
      $region10: #{_pallas_scale_bias.1} parent=5 // pred_check_branch
        %94 = sbr.rel (%p91) target = $region12
      $region11: #{_pallas_scale_bias.1} parent=5 // pred_region
        %s95 = ssub.s32 %s13, 1
      $region12: #{_pallas_scale_bias.1} parent=5 // pred_fallthru
        _
      %p96 = scmp.lt.s32.totalorder %s13, 4
      // Predicated region
      $region13: #{_pallas_scale_bias.1} parent=5 // pred_check
        %p97 = pneg %p96
      $region14: #{_pallas_scale_bias.1} parent=5 // pred_check_branch
        %99 = sbr.rel (%p97) target = $region16
      $region15: #{_pallas_scale_bias.1} parent=5 // pred_region
        // Predicated region
        $region17: #{_pallas_scale_bias.1} parent=15 // pred_check
          %p100 = pneg %p47
        $region18: #{_pallas_scale_bias.1} parent=15 // pred_check_branch
          %102 = sbr.rel (%p100) target = $region20
        $region19: #{_pallas_scale_bias.1} parent=15 // pred_region
          %s103 = sand.u32 %s37, 1
          %s104 = scalar_lea.sflag [#allocation3], %s103
          %s105 = sand.u32 %s37, 1
          %s106 = smul.addr %s105, 2048
          %s107 = scalar_lea.vmem [#allocation2], %s106
          %s108 = smul.u32 64, %s20
          %s109 = smul.u32 4, %s21
          %s111 = ssub.s32 32768, 32768
          %112 = vsyncadd %s104, %s111
          %s113 = smul.addr %s108, 8
          %s114 = sadd.s32 %s109, %s113
          %s115 = smul.addr %s114, 128
          %s116 = scalar_lea.hbm %s0, %s115
          %s117 = sshll.u32 %s107, 4
          %s118 = int_to_ptr.vmem [resolvable:$true] %s117
          %123 = dma.hbm_to_vmem [thread:$0]  %s116, 32768, %s118, %s104, 1024, 512, 32
        $region20: #{_pallas_scale_bias.1} parent=15 // pred_fallthru
          _
      $region16: #{_pallas_scale_bias.1} parent=5 // pred_fallthru
        _
      %p124 = scmp.le.s32.totalorder 1, %s13
      %p125 = scmp.lt.s32.totalorder %s13, 5
      %p126 = pnand %p124, %p125
      %p127 = pneg %p126
      // Predicated region
      $region21: #{_pallas_scale_bias.1} parent=5 // pred_check
        _
      $region22: #{_pallas_scale_bias.1} parent=5 // pred_check_branch
        %129 = sbr.rel (%p126) target = $region24
      $region23: #{_pallas_scale_bias.1} parent=5 // pred_region
        %s130 = ssub.s32 %s13, 1
        %s131 = sand.u32 %s40, 1
        %s132 = scalar_lea.sflag [#allocation3], %s131
        %s133 = sand.u32 %s40, 1
        %s134 = smul.addr %s133, 2048
        %s135 = scalar_lea.vmem [#allocation2], %s134
        // Predicated region
        $region25: #{_pallas_scale_bias.1} parent=23 // pred_check
          %p136 = pneg %p53
        $region26: #{_pallas_scale_bias.1} parent=23 // pred_check_branch
          %138 = sbr.rel (%p136) target = $region28
        $region27: #{_pallas_scale_bias.1} parent=23 // pred_region
          %139 = dma.done %s132, 32768
        $region28: #{_pallas_scale_bias.1} parent=23 // pred_fallthru
          _
        %s140 = sand.u32 %s40, 1
        %s141 = scalar_lea.sflag [#allocation3], %s140
        %s142 = sand.u32 %s40, 1
        %s143 = smul.addr %s142, 2048
        %s144 = scalar_lea.vmem [#allocation2], %s143
        %p145 = pneg %p53
        %p146 = pneg %p50
        %p147 = pneg %p81
        %p148 = pneg %p78
        %s149 = sand.u32 %s68, 1
        %s150 = scalar_lea.sflag [#allocation4], %s149
        %s151 = sand.u32 %s68, 1
        %s152 = smul.addr %s151, 2048
        %s153 = scalar_lea.vmem [#allocation5], %s152
        %s154 = smul.u32 64, %s22
        %s155 = smul.u32 4, %s23
        %s156 = smul.u32 64, %s22
        %s157 = smul.u32 4, %s23
        %v158 = vld [vmem:[%s135] sm:$0xff]
        %v159 = vld [vmem:[%s135 + $0x8] sm:$0xff]
        %v160 = vld [vmem:[%s135 + $0x10] sm:$0xff]
        %v161 = vld [vmem:[%s135 + $0x18] sm:$0xff]
        %v162 = vld [vmem:[%s135 + $0x20] sm:$0xff]
        %v163 = vld [vmem:[%s135 + $0x28] sm:$0xff]
        %v164 = vld [vmem:[%s135 + $0x30] sm:$0xff]
        %v165 = vld [vmem:[%s135 + $0x38] sm:$0xff]
        %v166 = vld [vmem:[%s135 + $0x40] sm:$0xff]
        %v167 = vld [vmem:[%s135 + $0x48] sm:$0xff]
        %v168 = vld [vmem:[%s135 + $0x50] sm:$0xff]
        %v169 = vld [vmem:[%s135 + $0x58] sm:$0xff]
        %v170 = vld [vmem:[%s135 + $0x60] sm:$0xff]
        %v171 = vld [vmem:[%s135 + $0x68] sm:$0xff]
        %v172 = vld [vmem:[%s135 + $0x70] sm:$0xff]
        %v173 = vld [vmem:[%s135 + $0x78] sm:$0xff]
        %v174 = vld [vmem:[%s135 + $0x80] sm:$0xff]
        %v175 = vld [vmem:[%s135 + $0x88] sm:$0xff]
        %v176 = vld [vmem:[%s135 + $0x90] sm:$0xff]
        %v177 = vld [vmem:[%s135 + $0x98] sm:$0xff]
        %v178 = vld [vmem:[%s135 + $0xa0] sm:$0xff]
        %v179 = vld [vmem:[%s135 + $0xa8] sm:$0xff]
        %v180 = vld [vmem:[%s135 + $0xb0] sm:$0xff]
        %v181 = vld [vmem:[%s135 + $0xb8] sm:$0xff]
        %v182 = vld [vmem:[%s135 + $0xc0] sm:$0xff]
        %v183 = vld [vmem:[%s135 + $0xc8] sm:$0xff]
        %v184 = vld [vmem:[%s135 + $0xd0] sm:$0xff]
        %v185 = vld [vmem:[%s135 + $0xd8] sm:$0xff]
        %v186 = vld [vmem:[%s135 + $0xe0] sm:$0xff]
        %v187 = vld [vmem:[%s135 + $0xe8] sm:$0xff]
        %v188 = vld [vmem:[%s135 + $0xf0] sm:$0xff]
        %v189 = vld [vmem:[%s135 + $0xf8] sm:$0xff]
        %v190 = vld [vmem:[%s135 + $0x100] sm:$0xff]
        %v191 = vld [vmem:[%s135 + $0x108] sm:$0xff]
        %v192 = vld [vmem:[%s135 + $0x110] sm:$0xff]
        %v193 = vld [vmem:[%s135 + $0x118] sm:$0xff]
        %v194 = vld [vmem:[%s135 + $0x120] sm:$0xff]
        %v195 = vld [vmem:[%s135 + $0x128] sm:$0xff]
        %v196 = vld [vmem:[%s135 + $0x130] sm:$0xff]
        %v197 = vld [vmem:[%s135 + $0x138] sm:$0xff]
        %v198 = vld [vmem:[%s135 + $0x140] sm:$0xff]
        %v199 = vld [vmem:[%s135 + $0x148] sm:$0xff]
        %v200 = vld [vmem:[%s135 + $0x150] sm:$0xff]
        %v201 = vld [vmem:[%s135 + $0x158] sm:$0xff]
        %v202 = vld [vmem:[%s135 + $0x160] sm:$0xff]
        %v203 = vld [vmem:[%s135 + $0x168] sm:$0xff]
        %v204 = vld [vmem:[%s135 + $0x170] sm:$0xff]
        %v205 = vld [vmem:[%s135 + $0x178] sm:$0xff]
        %v206 = vld [vmem:[%s135 + $0x180] sm:$0xff]
        %v207 = vld [vmem:[%s135 + $0x188] sm:$0xff]
        %v208 = vld [vmem:[%s135 + $0x190] sm:$0xff]
        %v209 = vld [vmem:[%s135 + $0x198] sm:$0xff]
        %v210 = vld [vmem:[%s135 + $0x1a0] sm:$0xff]
        %v211 = vld [vmem:[%s135 + $0x1a8] sm:$0xff]
        %v212 = vld [vmem:[%s135 + $0x1b0] sm:$0xff]
        %v213 = vld [vmem:[%s135 + $0x1b8] sm:$0xff]
        %v214 = vld [vmem:[%s135 + $0x1c0] sm:$0xff]
        %v215 = vld [vmem:[%s135 + $0x1c8] sm:$0xff]
        %v216 = vld [vmem:[%s135 + $0x1d0] sm:$0xff]
        %v217 = vld [vmem:[%s135 + $0x1d8] sm:$0xff]
        %v218 = vld [vmem:[%s135 + $0x1e0] sm:$0xff]
        %v219 = vld [vmem:[%s135 + $0x1e8] sm:$0xff]
        %v220 = vld [vmem:[%s135 + $0x1f0] sm:$0xff]
        %v221 = vld [vmem:[%s135 + $0x1f8] sm:$0xff]
        %v222 = vld [vmem:[%s135 + $0x200] sm:$0xff]
        %v223 = vld [vmem:[%s135 + $0x208] sm:$0xff]
        %v224 = vld [vmem:[%s135 + $0x210] sm:$0xff]
        %v225 = vld [vmem:[%s135 + $0x218] sm:$0xff]
        %v226 = vld [vmem:[%s135 + $0x220] sm:$0xff]
        %v227 = vld [vmem:[%s135 + $0x228] sm:$0xff]
        %v228 = vld [vmem:[%s135 + $0x230] sm:$0xff]
        %v229 = vld [vmem:[%s135 + $0x238] sm:$0xff]
        %v230 = vld [vmem:[%s135 + $0x240] sm:$0xff]
        %v231 = vld [vmem:[%s135 + $0x248] sm:$0xff]
        %v232 = vld [vmem:[%s135 + $0x250] sm:$0xff]
        %v233 = vld [vmem:[%s135 + $0x258] sm:$0xff]
        %v234 = vld [vmem:[%s135 + $0x260] sm:$0xff]
        %v235 = vld [vmem:[%s135 + $0x268] sm:$0xff]
        %v236 = vld [vmem:[%s135 + $0x270] sm:$0xff]
        %v237 = vld [vmem:[%s135 + $0x278] sm:$0xff]
        %v238 = vld [vmem:[%s135 + $0x280] sm:$0xff]
        %v239 = vld [vmem:[%s135 + $0x288] sm:$0xff]
        %v240 = vld [vmem:[%s135 + $0x290] sm:$0xff]
        %v241 = vld [vmem:[%s135 + $0x298] sm:$0xff]
        %v242 = vld [vmem:[%s135 + $0x2a0] sm:$0xff]
        %v243 = vld [vmem:[%s135 + $0x2a8] sm:$0xff]
        %v244 = vld [vmem:[%s135 + $0x2b0] sm:$0xff]
        %v245 = vld [vmem:[%s135 + $0x2b8] sm:$0xff]
        %v246 = vld [vmem:[%s135 + $0x2c0] sm:$0xff]
        %v247 = vld [vmem:[%s135 + $0x2c8] sm:$0xff]
        %v248 = vld [vmem:[%s135 + $0x2d0] sm:$0xff]
        %v249 = vld [vmem:[%s135 + $0x2d8] sm:$0xff]
        %v250 = vld [vmem:[%s135 + $0x2e0] sm:$0xff]
        %v251 = vld [vmem:[%s135 + $0x2e8] sm:$0xff]
        %v252 = vld [vmem:[%s135 + $0x2f0] sm:$0xff]
        %v253 = vld [vmem:[%s135 + $0x2f8] sm:$0xff]
        %v254 = vld [vmem:[%s135 + $0x300] sm:$0xff]
        %v255 = vld [vmem:[%s135 + $0x308] sm:$0xff]
        %v256 = vld [vmem:[%s135 + $0x310] sm:$0xff]
        %v257 = vld [vmem:[%s135 + $0x318] sm:$0xff]
        %v258 = vld [vmem:[%s135 + $0x320] sm:$0xff]
        %v259 = vld [vmem:[%s135 + $0x328] sm:$0xff]
        %v260 = vld [vmem:[%s135 + $0x330] sm:$0xff]
        %v261 = vld [vmem:[%s135 + $0x338] sm:$0xff]
        %v262 = vld [vmem:[%s135 + $0x340] sm:$0xff]
        %v263 = vld [vmem:[%s135 + $0x348] sm:$0xff]
        %v264 = vld [vmem:[%s135 + $0x350] sm:$0xff]
        %v265 = vld [vmem:[%s135 + $0x358] sm:$0xff]
        %v266 = vld [vmem:[%s135 + $0x360] sm:$0xff]
        %v267 = vld [vmem:[%s135 + $0x368] sm:$0xff]
        %v268 = vld [vmem:[%s135 + $0x370] sm:$0xff]
        %v269 = vld [vmem:[%s135 + $0x378] sm:$0xff]
        %v270 = vld [vmem:[%s135 + $0x380] sm:$0xff]
        %v271 = vld [vmem:[%s135 + $0x388] sm:$0xff]
        %v272 = vld [vmem:[%s135 + $0x390] sm:$0xff]
        %v273 = vld [vmem:[%s135 + $0x398] sm:$0xff]
        %v274 = vld [vmem:[%s135 + $0x3a0] sm:$0xff]
        %v275 = vld [vmem:[%s135 + $0x3a8] sm:$0xff]
        %v276 = vld [vmem:[%s135 + $0x3b0] sm:$0xff]
        %v277 = vld [vmem:[%s135 + $0x3b8] sm:$0xff]
        %v278 = vld [vmem:[%s135 + $0x3c0] sm:$0xff]
        %v279 = vld [vmem:[%s135 + $0x3c8] sm:$0xff]
        %v280 = vld [vmem:[%s135 + $0x3d0] sm:$0xff]
        %v281 = vld [vmem:[%s135 + $0x3d8] sm:$0xff]
        %v282 = vld [vmem:[%s135 + $0x3e0] sm:$0xff]
        %v283 = vld [vmem:[%s135 + $0x3e8] sm:$0xff]
        %v284 = vld [vmem:[%s135 + $0x3f0] sm:$0xff]
        %v285 = vld [vmem:[%s135 + $0x3f8] sm:$0xff]
        %v286 = vld [vmem:[%s135 + $0x400] sm:$0xff]
        %v287 = vld [vmem:[%s135 + $0x408] sm:$0xff]
        %v288 = vld [vmem:[%s135 + $0x410] sm:$0xff]
        %v289 = vld [vmem:[%s135 + $0x418] sm:$0xff]
        %v290 = vld [vmem:[%s135 + $0x420] sm:$0xff]
        %v291 = vld [vmem:[%s135 + $0x428] sm:$0xff]
        %v292 = vld [vmem:[%s135 + $0x430] sm:$0xff]
        %v293 = vld [vmem:[%s135 + $0x438] sm:$0xff]
        %v294 = vld [vmem:[%s135 + $0x440] sm:$0xff]
        %v295 = vld [vmem:[%s135 + $0x448] sm:$0xff]
        %v296 = vld [vmem:[%s135 + $0x450] sm:$0xff]
        %v297 = vld [vmem:[%s135 + $0x458] sm:$0xff]
        %v298 = vld [vmem:[%s135 + $0x460] sm:$0xff]
        %v299 = vld [vmem:[%s135 + $0x468] sm:$0xff]
        %v300 = vld [vmem:[%s135 + $0x470] sm:$0xff]
        %v301 = vld [vmem:[%s135 + $0x478] sm:$0xff]
        %v302 = vld [vmem:[%s135 + $0x480] sm:$0xff]
        %v303 = vld [vmem:[%s135 + $0x488] sm:$0xff]
        %v304 = vld [vmem:[%s135 + $0x490] sm:$0xff]
        %v305 = vld [vmem:[%s135 + $0x498] sm:$0xff]
        %v306 = vld [vmem:[%s135 + $0x4a0] sm:$0xff]
        %v307 = vld [vmem:[%s135 + $0x4a8] sm:$0xff]
        %v308 = vld [vmem:[%s135 + $0x4b0] sm:$0xff]
        %v309 = vld [vmem:[%s135 + $0x4b8] sm:$0xff]
        %v310 = vld [vmem:[%s135 + $0x4c0] sm:$0xff]
        %v311 = vld [vmem:[%s135 + $0x4c8] sm:$0xff]
        %v312 = vld [vmem:[%s135 + $0x4d0] sm:$0xff]
        %v313 = vld [vmem:[%s135 + $0x4d8] sm:$0xff]
        %v314 = vld [vmem:[%s135 + $0x4e0] sm:$0xff]
        %v315 = vld [vmem:[%s135 + $0x4e8] sm:$0xff]
        %v316 = vld [vmem:[%s135 + $0x4f0] sm:$0xff]
        %v317 = vld [vmem:[%s135 + $0x4f8] sm:$0xff]
        %v318 = vld [vmem:[%s135 + $0x500] sm:$0xff]
        %v319 = vld [vmem:[%s135 + $0x508] sm:$0xff]
        %v320 = vld [vmem:[%s135 + $0x510] sm:$0xff]
        %v321 = vld [vmem:[%s135 + $0x518] sm:$0xff]
        %v322 = vld [vmem:[%s135 + $0x520] sm:$0xff]
        %v323 = vld [vmem:[%s135 + $0x528] sm:$0xff]
        %v324 = vld [vmem:[%s135 + $0x530] sm:$0xff]
        %v325 = vld [vmem:[%s135 + $0x538] sm:$0xff]
        %v326 = vld [vmem:[%s135 + $0x540] sm:$0xff]
        %v327 = vld [vmem:[%s135 + $0x548] sm:$0xff]
        %v328 = vld [vmem:[%s135 + $0x550] sm:$0xff]
        %v329 = vld [vmem:[%s135 + $0x558] sm:$0xff]
        %v330 = vld [vmem:[%s135 + $0x560] sm:$0xff]
        %v331 = vld [vmem:[%s135 + $0x568] sm:$0xff]
        %v332 = vld [vmem:[%s135 + $0x570] sm:$0xff]
        %v333 = vld [vmem:[%s135 + $0x578] sm:$0xff]
        %v334 = vld [vmem:[%s135 + $0x580] sm:$0xff]
        %v335 = vld [vmem:[%s135 + $0x588] sm:$0xff]
        %v336 = vld [vmem:[%s135 + $0x590] sm:$0xff]
        %v337 = vld [vmem:[%s135 + $0x598] sm:$0xff]
        %v338 = vld [vmem:[%s135 + $0x5a0] sm:$0xff]
        %v339 = vld [vmem:[%s135 + $0x5a8] sm:$0xff]
        %v340 = vld [vmem:[%s135 + $0x5b0] sm:$0xff]
        %v341 = vld [vmem:[%s135 + $0x5b8] sm:$0xff]
        %v342 = vld [vmem:[%s135 + $0x5c0] sm:$0xff]
        %v343 = vld [vmem:[%s135 + $0x5c8] sm:$0xff]
        %v344 = vld [vmem:[%s135 + $0x5d0] sm:$0xff]
        %v345 = vld [vmem:[%s135 + $0x5d8] sm:$0xff]
        %v346 = vld [vmem:[%s135 + $0x5e0] sm:$0xff]
        %v347 = vld [vmem:[%s135 + $0x5e8] sm:$0xff]
        %v348 = vld [vmem:[%s135 + $0x5f0] sm:$0xff]
        %v349 = vld [vmem:[%s135 + $0x5f8] sm:$0xff]
        %v350 = vld [vmem:[%s135 + $0x600] sm:$0xff]
        %v351 = vld [vmem:[%s135 + $0x608] sm:$0xff]
        %v352 = vld [vmem:[%s135 + $0x610] sm:$0xff]
        %v353 = vld [vmem:[%s135 + $0x618] sm:$0xff]
        %v354 = vld [vmem:[%s135 + $0x620] sm:$0xff]
        %v355 = vld [vmem:[%s135 + $0x628] sm:$0xff]
        %v356 = vld [vmem:[%s135 + $0x630] sm:$0xff]
        %v357 = vld [vmem:[%s135 + $0x638] sm:$0xff]
        %v358 = vld [vmem:[%s135 + $0x640] sm:$0xff]
        %v359 = vld [vmem:[%s135 + $0x648] sm:$0xff]
        %v360 = vld [vmem:[%s135 + $0x650] sm:$0xff]
        %v361 = vld [vmem:[%s135 + $0x658] sm:$0xff]
        %v362 = vld [vmem:[%s135 + $0x660] sm:$0xff]
        %v363 = vld [vmem:[%s135 + $0x668] sm:$0xff]
        %v364 = vld [vmem:[%s135 + $0x670] sm:$0xff]
        %v365 = vld [vmem:[%s135 + $0x678] sm:$0xff]
        %v366 = vld [vmem:[%s135 + $0x680] sm:$0xff]
        %v367 = vld [vmem:[%s135 + $0x688] sm:$0xff]
        %v368 = vld [vmem:[%s135 + $0x690] sm:$0xff]
        %v369 = vld [vmem:[%s135 + $0x698] sm:$0xff]
        %v370 = vld [vmem:[%s135 + $0x6a0] sm:$0xff]
        %v371 = vld [vmem:[%s135 + $0x6a8] sm:$0xff]
        %v372 = vld [vmem:[%s135 + $0x6b0] sm:$0xff]
        %v373 = vld [vmem:[%s135 + $0x6b8] sm:$0xff]
        %v374 = vld [vmem:[%s135 + $0x6c0] sm:$0xff]
        %v375 = vld [vmem:[%s135 + $0x6c8] sm:$0xff]
        %v376 = vld [vmem:[%s135 + $0x6d0] sm:$0xff]
        %v377 = vld [vmem:[%s135 + $0x6d8] sm:$0xff]
        %v378 = vld [vmem:[%s135 + $0x6e0] sm:$0xff]
        %v379 = vld [vmem:[%s135 + $0x6e8] sm:$0xff]
        %v380 = vld [vmem:[%s135 + $0x6f0] sm:$0xff]
        %v381 = vld [vmem:[%s135 + $0x6f8] sm:$0xff]
        %v382 = vld [vmem:[%s135 + $0x700] sm:$0xff]
        %v383 = vld [vmem:[%s135 + $0x708] sm:$0xff]
        %v384 = vld [vmem:[%s135 + $0x710] sm:$0xff]
        %v385 = vld [vmem:[%s135 + $0x718] sm:$0xff]
        %v386 = vld [vmem:[%s135 + $0x720] sm:$0xff]
        %v387 = vld [vmem:[%s135 + $0x728] sm:$0xff]
        %v388 = vld [vmem:[%s135 + $0x730] sm:$0xff]
        %v389 = vld [vmem:[%s135 + $0x738] sm:$0xff]
        %v390 = vld [vmem:[%s135 + $0x740] sm:$0xff]
        %v391 = vld [vmem:[%s135 + $0x748] sm:$0xff]
        %v392 = vld [vmem:[%s135 + $0x750] sm:$0xff]
        %v393 = vld [vmem:[%s135 + $0x758] sm:$0xff]
        %v394 = vld [vmem:[%s135 + $0x760] sm:$0xff]
        %v395 = vld [vmem:[%s135 + $0x768] sm:$0xff]
        %v396 = vld [vmem:[%s135 + $0x770] sm:$0xff]
        %v397 = vld [vmem:[%s135 + $0x778] sm:$0xff]
        %v398 = vld [vmem:[%s135 + $0x780] sm:$0xff]
        %v399 = vld [vmem:[%s135 + $0x788] sm:$0xff]
        %v400 = vld [vmem:[%s135 + $0x790] sm:$0xff]
        %v401 = vld [vmem:[%s135 + $0x798] sm:$0xff]
        %v402 = vld [vmem:[%s135 + $0x7a0] sm:$0xff]
        %v403 = vld [vmem:[%s135 + $0x7a8] sm:$0xff]
        %v404 = vld [vmem:[%s135 + $0x7b0] sm:$0xff]
        %v405 = vld [vmem:[%s135 + $0x7b8] sm:$0xff]
        %v406 = vld [vmem:[%s135 + $0x7c0] sm:$0xff]
        %v407 = vld [vmem:[%s135 + $0x7c8] sm:$0xff]
        %v408 = vld [vmem:[%s135 + $0x7d0] sm:$0xff]
        %v409 = vld [vmem:[%s135 + $0x7d8] sm:$0xff]
        %v410 = vld [vmem:[%s135 + $0x7e0] sm:$0xff]
        %v411 = vld [vmem:[%s135 + $0x7e8] sm:$0xff]
        %v412 = vld [vmem:[%s135 + $0x7f0] sm:$0xff]
        %v413 = vld [vmem:[%s135 + $0x7f8] sm:$0xff]
        %v414 = vmul.f32 %v158, 2.0
        %v415 = vmul.f32 %v159, 2.0
        %v416 = vmul.f32 %v160, 2.0
        %v417 = vmul.f32 %v161, 2.0
        %v418 = vmul.f32 %v162, 2.0
        %v419 = vmul.f32 %v163, 2.0
        %v420 = vmul.f32 %v164, 2.0
        %v421 = vmul.f32 %v165, 2.0
        %v422 = vmul.f32 %v166, 2.0
        %v423 = vmul.f32 %v167, 2.0
        %v424 = vmul.f32 %v168, 2.0
        %v425 = vmul.f32 %v169, 2.0
        %v426 = vmul.f32 %v170, 2.0
        %v427 = vmul.f32 %v171, 2.0
        %v428 = vmul.f32 %v172, 2.0
        %v429 = vmul.f32 %v173, 2.0
        %v430 = vmul.f32 %v174, 2.0
        %v431 = vmul.f32 %v175, 2.0
        %v432 = vmul.f32 %v176, 2.0
        %v433 = vmul.f32 %v177, 2.0
        %v434 = vmul.f32 %v178, 2.0
        %v435 = vmul.f32 %v179, 2.0
        %v436 = vmul.f32 %v180, 2.0
        %v437 = vmul.f32 %v181, 2.0
        %v438 = vmul.f32 %v182, 2.0
        %v439 = vmul.f32 %v183, 2.0
        %v440 = vmul.f32 %v184, 2.0
        %v441 = vmul.f32 %v185, 2.0
        %v442 = vmul.f32 %v186, 2.0
        %v443 = vmul.f32 %v187, 2.0
        %v444 = vmul.f32 %v188, 2.0
        %v445 = vmul.f32 %v189, 2.0
        %v446 = vmul.f32 %v190, 2.0
        %v447 = vmul.f32 %v191, 2.0
        %v448 = vmul.f32 %v192, 2.0
        %v449 = vmul.f32 %v193, 2.0
        %v450 = vmul.f32 %v194, 2.0
        %v451 = vmul.f32 %v195, 2.0
        %v452 = vmul.f32 %v196, 2.0
        %v453 = vmul.f32 %v197, 2.0
        %v454 = vmul.f32 %v198, 2.0
        %v455 = vmul.f32 %v199, 2.0
        %v456 = vmul.f32 %v200, 2.0
        %v457 = vmul.f32 %v201, 2.0
        %v458 = vmul.f32 %v202, 2.0
        %v459 = vmul.f32 %v203, 2.0
        %v460 = vmul.f32 %v204, 2.0
        %v461 = vmul.f32 %v205, 2.0
        %v462 = vmul.f32 %v206, 2.0
        %v463 = vmul.f32 %v207, 2.0
        %v464 = vmul.f32 %v208, 2.0
        %v465 = vmul.f32 %v209, 2.0
        %v466 = vmul.f32 %v210, 2.0
        %v467 = vmul.f32 %v211, 2.0
        %v468 = vmul.f32 %v212, 2.0
        %v469 = vmul.f32 %v213, 2.0
        %v470 = vmul.f32 %v214, 2.0
        %v471 = vmul.f32 %v215, 2.0
        %v472 = vmul.f32 %v216, 2.0
        %v473 = vmul.f32 %v217, 2.0
        %v474 = vmul.f32 %v218, 2.0
        %v475 = vmul.f32 %v219, 2.0
        %v476 = vmul.f32 %v220, 2.0
        %v477 = vmul.f32 %v221, 2.0
        %v478 = vmul.f32 %v222, 2.0
        %v479 = vmul.f32 %v223, 2.0
        %v480 = vmul.f32 %v224, 2.0
        %v481 = vmul.f32 %v225, 2.0
        %v482 = vmul.f32 %v226, 2.0
        %v483 = vmul.f32 %v227, 2.0
        %v484 = vmul.f32 %v228, 2.0
        %v485 = vmul.f32 %v229, 2.0
        %v486 = vmul.f32 %v230, 2.0
        %v487 = vmul.f32 %v231, 2.0
        %v488 = vmul.f32 %v232, 2.0
        %v489 = vmul.f32 %v233, 2.0
        %v490 = vmul.f32 %v234, 2.0
        %v491 = vmul.f32 %v235, 2.0
        %v492 = vmul.f32 %v236, 2.0
        %v493 = vmul.f32 %v237, 2.0
        %v494 = vmul.f32 %v238, 2.0
        %v495 = vmul.f32 %v239, 2.0
        %v496 = vmul.f32 %v240, 2.0
        %v497 = vmul.f32 %v241, 2.0
        %v498 = vmul.f32 %v242, 2.0
        %v499 = vmul.f32 %v243, 2.0
        %v500 = vmul.f32 %v244, 2.0
        %v501 = vmul.f32 %v245, 2.0
        %v502 = vmul.f32 %v246, 2.0
        %v503 = vmul.f32 %v247, 2.0
        %v504 = vmul.f32 %v248, 2.0
        %v505 = vmul.f32 %v249, 2.0
        %v506 = vmul.f32 %v250, 2.0
        %v507 = vmul.f32 %v251, 2.0
        %v508 = vmul.f32 %v252, 2.0
        %v509 = vmul.f32 %v253, 2.0
        %v510 = vmul.f32 %v254, 2.0
        %v511 = vmul.f32 %v255, 2.0
        %v512 = vmul.f32 %v256, 2.0
        %v513 = vmul.f32 %v257, 2.0
        %v514 = vmul.f32 %v258, 2.0
        %v515 = vmul.f32 %v259, 2.0
        %v516 = vmul.f32 %v260, 2.0
        %v517 = vmul.f32 %v261, 2.0
        %v518 = vmul.f32 %v262, 2.0
        %v519 = vmul.f32 %v263, 2.0
        %v520 = vmul.f32 %v264, 2.0
        %v521 = vmul.f32 %v265, 2.0
        %v522 = vmul.f32 %v266, 2.0
        %v523 = vmul.f32 %v267, 2.0
        %v524 = vmul.f32 %v268, 2.0
        %v525 = vmul.f32 %v269, 2.0
        %v526 = vmul.f32 %v270, 2.0
        %v527 = vmul.f32 %v271, 2.0
        %v528 = vmul.f32 %v272, 2.0
        %v529 = vmul.f32 %v273, 2.0
        %v530 = vmul.f32 %v274, 2.0
        %v531 = vmul.f32 %v275, 2.0
        %v532 = vmul.f32 %v276, 2.0
        %v533 = vmul.f32 %v277, 2.0
        %v534 = vmul.f32 %v278, 2.0
        %v535 = vmul.f32 %v279, 2.0
        %v536 = vmul.f32 %v280, 2.0
        %v537 = vmul.f32 %v281, 2.0
        %v538 = vmul.f32 %v282, 2.0
        %v539 = vmul.f32 %v283, 2.0
        %v540 = vmul.f32 %v284, 2.0
        %v541 = vmul.f32 %v285, 2.0
        %v542 = vmul.f32 %v286, 2.0
        %v543 = vmul.f32 %v287, 2.0
        %v544 = vmul.f32 %v288, 2.0
        %v545 = vmul.f32 %v289, 2.0
        %v546 = vmul.f32 %v290, 2.0
        %v547 = vmul.f32 %v291, 2.0
        %v548 = vmul.f32 %v292, 2.0
        %v549 = vmul.f32 %v293, 2.0
        %v550 = vmul.f32 %v294, 2.0
        %v551 = vmul.f32 %v295, 2.0
        %v552 = vmul.f32 %v296, 2.0
        %v553 = vmul.f32 %v297, 2.0
        %v554 = vmul.f32 %v298, 2.0
        %v555 = vmul.f32 %v299, 2.0
        %v556 = vmul.f32 %v300, 2.0
        %v557 = vmul.f32 %v301, 2.0
        %v558 = vmul.f32 %v302, 2.0
        %v559 = vmul.f32 %v303, 2.0
        %v560 = vmul.f32 %v304, 2.0
        %v561 = vmul.f32 %v305, 2.0
        %v562 = vmul.f32 %v306, 2.0
        %v563 = vmul.f32 %v307, 2.0
        %v564 = vmul.f32 %v308, 2.0
        %v565 = vmul.f32 %v309, 2.0
        %v566 = vmul.f32 %v310, 2.0
        %v567 = vmul.f32 %v311, 2.0
        %v568 = vmul.f32 %v312, 2.0
        %v569 = vmul.f32 %v313, 2.0
        %v570 = vmul.f32 %v314, 2.0
        %v571 = vmul.f32 %v315, 2.0
        %v572 = vmul.f32 %v316, 2.0
        %v573 = vmul.f32 %v317, 2.0
        %v574 = vmul.f32 %v318, 2.0
        %v575 = vmul.f32 %v319, 2.0
        %v576 = vmul.f32 %v320, 2.0
        %v577 = vmul.f32 %v321, 2.0
        %v578 = vmul.f32 %v322, 2.0
        %v579 = vmul.f32 %v323, 2.0
        %v580 = vmul.f32 %v324, 2.0
        %v581 = vmul.f32 %v325, 2.0
        %v582 = vmul.f32 %v326, 2.0
        %v583 = vmul.f32 %v327, 2.0
        %v584 = vmul.f32 %v328, 2.0
        %v585 = vmul.f32 %v329, 2.0
        %v586 = vmul.f32 %v330, 2.0
        %v587 = vmul.f32 %v331, 2.0
        %v588 = vmul.f32 %v332, 2.0
        %v589 = vmul.f32 %v333, 2.0
        %v590 = vmul.f32 %v334, 2.0
        %v591 = vmul.f32 %v335, 2.0
        %v592 = vmul.f32 %v336, 2.0
        %v593 = vmul.f32 %v337, 2.0
        %v594 = vmul.f32 %v338, 2.0
        %v595 = vmul.f32 %v339, 2.0
        %v596 = vmul.f32 %v340, 2.0
        %v597 = vmul.f32 %v341, 2.0
        %v598 = vmul.f32 %v342, 2.0
        %v599 = vmul.f32 %v343, 2.0
        %v600 = vmul.f32 %v344, 2.0
        %v601 = vmul.f32 %v345, 2.0
        %v602 = vmul.f32 %v346, 2.0
        %v603 = vmul.f32 %v347, 2.0
        %v604 = vmul.f32 %v348, 2.0
        %v605 = vmul.f32 %v349, 2.0
        %v606 = vmul.f32 %v350, 2.0
        %v607 = vmul.f32 %v351, 2.0
        %v608 = vmul.f32 %v352, 2.0
        %v609 = vmul.f32 %v353, 2.0
        %v610 = vmul.f32 %v354, 2.0
        %v611 = vmul.f32 %v355, 2.0
        %v612 = vmul.f32 %v356, 2.0
        %v613 = vmul.f32 %v357, 2.0
        %v614 = vmul.f32 %v358, 2.0
        %v615 = vmul.f32 %v359, 2.0
        %v616 = vmul.f32 %v360, 2.0
        %v617 = vmul.f32 %v361, 2.0
        %v618 = vmul.f32 %v362, 2.0
        %v619 = vmul.f32 %v363, 2.0
        %v620 = vmul.f32 %v364, 2.0
        %v621 = vmul.f32 %v365, 2.0
        %v622 = vmul.f32 %v366, 2.0
        %v623 = vmul.f32 %v367, 2.0
        %v624 = vmul.f32 %v368, 2.0
        %v625 = vmul.f32 %v369, 2.0
        %v626 = vmul.f32 %v370, 2.0
        %v627 = vmul.f32 %v371, 2.0
        %v628 = vmul.f32 %v372, 2.0
        %v629 = vmul.f32 %v373, 2.0
        %v630 = vmul.f32 %v374, 2.0
        %v631 = vmul.f32 %v375, 2.0
        %v632 = vmul.f32 %v376, 2.0
        %v633 = vmul.f32 %v377, 2.0
        %v634 = vmul.f32 %v378, 2.0
        %v635 = vmul.f32 %v379, 2.0
        %v636 = vmul.f32 %v380, 2.0
        %v637 = vmul.f32 %v381, 2.0
        %v638 = vmul.f32 %v382, 2.0
        %v639 = vmul.f32 %v383, 2.0
        %v640 = vmul.f32 %v384, 2.0
        %v641 = vmul.f32 %v385, 2.0
        %v642 = vmul.f32 %v386, 2.0
        %v643 = vmul.f32 %v387, 2.0
        %v644 = vmul.f32 %v388, 2.0
        %v645 = vmul.f32 %v389, 2.0
        %v646 = vmul.f32 %v390, 2.0
        %v647 = vmul.f32 %v391, 2.0
        %v648 = vmul.f32 %v392, 2.0
        %v649 = vmul.f32 %v393, 2.0
        %v650 = vmul.f32 %v394, 2.0
        %v651 = vmul.f32 %v395, 2.0
        %v652 = vmul.f32 %v396, 2.0
        %v653 = vmul.f32 %v397, 2.0
        %v654 = vmul.f32 %v398, 2.0
        %v655 = vmul.f32 %v399, 2.0
        %v656 = vmul.f32 %v400, 2.0
        %v657 = vmul.f32 %v401, 2.0
        %v658 = vmul.f32 %v402, 2.0
        %v659 = vmul.f32 %v403, 2.0
        %v660 = vmul.f32 %v404, 2.0
        %v661 = vmul.f32 %v405, 2.0
        %v662 = vmul.f32 %v406, 2.0
        %v663 = vmul.f32 %v407, 2.0
        %v664 = vmul.f32 %v408, 2.0
        %v665 = vmul.f32 %v409, 2.0
        %v666 = vmul.f32 %v410, 2.0
        %v667 = vmul.f32 %v411, 2.0
        %v668 = vmul.f32 %v412, 2.0
        %v669 = vmul.f32 %v413, 2.0
        %v670 = vadd.f32 %v414, 1.0
        %v671 = vadd.f32 %v415, 1.0
        %v672 = vadd.f32 %v416, 1.0
        %v673 = vadd.f32 %v417, 1.0
        %v674 = vadd.f32 %v418, 1.0
        %v675 = vadd.f32 %v419, 1.0
        %v676 = vadd.f32 %v420, 1.0
        %v677 = vadd.f32 %v421, 1.0
        %v678 = vadd.f32 %v422, 1.0
        %v679 = vadd.f32 %v423, 1.0
        %v680 = vadd.f32 %v424, 1.0
        %v681 = vadd.f32 %v425, 1.0
        %v682 = vadd.f32 %v426, 1.0
        %v683 = vadd.f32 %v427, 1.0
        %v684 = vadd.f32 %v428, 1.0
        %v685 = vadd.f32 %v429, 1.0
        %v686 = vadd.f32 %v430, 1.0
        %v687 = vadd.f32 %v431, 1.0
        %v688 = vadd.f32 %v432, 1.0
        %v689 = vadd.f32 %v433, 1.0
        %v690 = vadd.f32 %v434, 1.0
        %v691 = vadd.f32 %v435, 1.0
        %v692 = vadd.f32 %v436, 1.0
        %v693 = vadd.f32 %v437, 1.0
        %v694 = vadd.f32 %v438, 1.0
        %v695 = vadd.f32 %v439, 1.0
        %v696 = vadd.f32 %v440, 1.0
        %v697 = vadd.f32 %v441, 1.0
        %v698 = vadd.f32 %v442, 1.0
        %v699 = vadd.f32 %v443, 1.0
        %v700 = vadd.f32 %v444, 1.0
        %v701 = vadd.f32 %v445, 1.0
        %v702 = vadd.f32 %v446, 1.0
        %v703 = vadd.f32 %v447, 1.0
        %v704 = vadd.f32 %v448, 1.0
        %v705 = vadd.f32 %v449, 1.0
        %v706 = vadd.f32 %v450, 1.0
        %v707 = vadd.f32 %v451, 1.0
        %v708 = vadd.f32 %v452, 1.0
        %v709 = vadd.f32 %v453, 1.0
        %v710 = vadd.f32 %v454, 1.0
        %v711 = vadd.f32 %v455, 1.0
        %v712 = vadd.f32 %v456, 1.0
        %v713 = vadd.f32 %v457, 1.0
        %v714 = vadd.f32 %v458, 1.0
        %v715 = vadd.f32 %v459, 1.0
        %v716 = vadd.f32 %v460, 1.0
        %v717 = vadd.f32 %v461, 1.0
        %v718 = vadd.f32 %v462, 1.0
        %v719 = vadd.f32 %v463, 1.0
        %v720 = vadd.f32 %v464, 1.0
        %v721 = vadd.f32 %v465, 1.0
        %v722 = vadd.f32 %v466, 1.0
        %v723 = vadd.f32 %v467, 1.0
        %v724 = vadd.f32 %v468, 1.0
        %v725 = vadd.f32 %v469, 1.0
        %v726 = vadd.f32 %v470, 1.0
        %v727 = vadd.f32 %v471, 1.0
        %v728 = vadd.f32 %v472, 1.0
        %v729 = vadd.f32 %v473, 1.0
        %v730 = vadd.f32 %v474, 1.0
        %v731 = vadd.f32 %v475, 1.0
        %v732 = vadd.f32 %v476, 1.0
        %v733 = vadd.f32 %v477, 1.0
        %v734 = vadd.f32 %v478, 1.0
        %v735 = vadd.f32 %v479, 1.0
        %v736 = vadd.f32 %v480, 1.0
        %v737 = vadd.f32 %v481, 1.0
        %v738 = vadd.f32 %v482, 1.0
        %v739 = vadd.f32 %v483, 1.0
        %v740 = vadd.f32 %v484, 1.0
        %v741 = vadd.f32 %v485, 1.0
        %v742 = vadd.f32 %v486, 1.0
        %v743 = vadd.f32 %v487, 1.0
        %v744 = vadd.f32 %v488, 1.0
        %v745 = vadd.f32 %v489, 1.0
        %v746 = vadd.f32 %v490, 1.0
        %v747 = vadd.f32 %v491, 1.0
        %v748 = vadd.f32 %v492, 1.0
        %v749 = vadd.f32 %v493, 1.0
        %v750 = vadd.f32 %v494, 1.0
        %v751 = vadd.f32 %v495, 1.0
        %v752 = vadd.f32 %v496, 1.0
        %v753 = vadd.f32 %v497, 1.0
        %v754 = vadd.f32 %v498, 1.0
        %v755 = vadd.f32 %v499, 1.0
        %v756 = vadd.f32 %v500, 1.0
        %v757 = vadd.f32 %v501, 1.0
        %v758 = vadd.f32 %v502, 1.0
        %v759 = vadd.f32 %v503, 1.0
        %v760 = vadd.f32 %v504, 1.0
        %v761 = vadd.f32 %v505, 1.0
        %v762 = vadd.f32 %v506, 1.0
        %v763 = vadd.f32 %v507, 1.0
        %v764 = vadd.f32 %v508, 1.0
        %v765 = vadd.f32 %v509, 1.0
        %v766 = vadd.f32 %v510, 1.0
        %v767 = vadd.f32 %v511, 1.0
        %v768 = vadd.f32 %v512, 1.0
        %v769 = vadd.f32 %v513, 1.0
        %v770 = vadd.f32 %v514, 1.0
        %v771 = vadd.f32 %v515, 1.0
        %v772 = vadd.f32 %v516, 1.0
        %v773 = vadd.f32 %v517, 1.0
        %v774 = vadd.f32 %v518, 1.0
        %v775 = vadd.f32 %v519, 1.0
        %v776 = vadd.f32 %v520, 1.0
        %v777 = vadd.f32 %v521, 1.0
        %v778 = vadd.f32 %v522, 1.0
        %v779 = vadd.f32 %v523, 1.0
        %v780 = vadd.f32 %v524, 1.0
        %v781 = vadd.f32 %v525, 1.0
        %v782 = vadd.f32 %v526, 1.0
        %v783 = vadd.f32 %v527, 1.0
        %v784 = vadd.f32 %v528, 1.0
        %v785 = vadd.f32 %v529, 1.0
        %v786 = vadd.f32 %v530, 1.0
        %v787 = vadd.f32 %v531, 1.0
        %v788 = vadd.f32 %v532, 1.0
        %v789 = vadd.f32 %v533, 1.0
        %v790 = vadd.f32 %v534, 1.0
        %v791 = vadd.f32 %v535, 1.0
        %v792 = vadd.f32 %v536, 1.0
        %v793 = vadd.f32 %v537, 1.0
        %v794 = vadd.f32 %v538, 1.0
        %v795 = vadd.f32 %v539, 1.0
        %v796 = vadd.f32 %v540, 1.0
        %v797 = vadd.f32 %v541, 1.0
        %v798 = vadd.f32 %v542, 1.0
        %v799 = vadd.f32 %v543, 1.0
        %v800 = vadd.f32 %v544, 1.0
        %v801 = vadd.f32 %v545, 1.0
        %v802 = vadd.f32 %v546, 1.0
        %v803 = vadd.f32 %v547, 1.0
        %v804 = vadd.f32 %v548, 1.0
        %v805 = vadd.f32 %v549, 1.0
        %v806 = vadd.f32 %v550, 1.0
        %v807 = vadd.f32 %v551, 1.0
        %v808 = vadd.f32 %v552, 1.0
        %v809 = vadd.f32 %v553, 1.0
        %v810 = vadd.f32 %v554, 1.0
        %v811 = vadd.f32 %v555, 1.0
        %v812 = vadd.f32 %v556, 1.0
        %v813 = vadd.f32 %v557, 1.0
        %v814 = vadd.f32 %v558, 1.0
        %v815 = vadd.f32 %v559, 1.0
        %v816 = vadd.f32 %v560, 1.0
        %v817 = vadd.f32 %v561, 1.0
        %v818 = vadd.f32 %v562, 1.0
        %v819 = vadd.f32 %v563, 1.0
        %v820 = vadd.f32 %v564, 1.0
        %v821 = vadd.f32 %v565, 1.0
        %v822 = vadd.f32 %v566, 1.0
        %v823 = vadd.f32 %v567, 1.0
        %v824 = vadd.f32 %v568, 1.0
        %v825 = vadd.f32 %v569, 1.0
        %v826 = vadd.f32 %v570, 1.0
        %v827 = vadd.f32 %v571, 1.0
        %v828 = vadd.f32 %v572, 1.0
        %v829 = vadd.f32 %v573, 1.0
        %v830 = vadd.f32 %v574, 1.0
        %v831 = vadd.f32 %v575, 1.0
        %v832 = vadd.f32 %v576, 1.0
        %v833 = vadd.f32 %v577, 1.0
        %v834 = vadd.f32 %v578, 1.0
        %v835 = vadd.f32 %v579, 1.0
        %v836 = vadd.f32 %v580, 1.0
        %v837 = vadd.f32 %v581, 1.0
        %v838 = vadd.f32 %v582, 1.0
        %v839 = vadd.f32 %v583, 1.0
        %v840 = vadd.f32 %v584, 1.0
        %v841 = vadd.f32 %v585, 1.0
        %v842 = vadd.f32 %v586, 1.0
        %v843 = vadd.f32 %v587, 1.0
        %v844 = vadd.f32 %v588, 1.0
        %v845 = vadd.f32 %v589, 1.0
        %v846 = vadd.f32 %v590, 1.0
        %v847 = vadd.f32 %v591, 1.0
        %v848 = vadd.f32 %v592, 1.0
        %v849 = vadd.f32 %v593, 1.0
        %v850 = vadd.f32 %v594, 1.0
        %v851 = vadd.f32 %v595, 1.0
        %v852 = vadd.f32 %v596, 1.0
        %v853 = vadd.f32 %v597, 1.0
        %v854 = vadd.f32 %v598, 1.0
        %v855 = vadd.f32 %v599, 1.0
        %v856 = vadd.f32 %v600, 1.0
        %v857 = vadd.f32 %v601, 1.0
        %v858 = vadd.f32 %v602, 1.0
        %v859 = vadd.f32 %v603, 1.0
        %v860 = vadd.f32 %v604, 1.0
        %v861 = vadd.f32 %v605, 1.0
        %v862 = vadd.f32 %v606, 1.0
        %v863 = vadd.f32 %v607, 1.0
        %v864 = vadd.f32 %v608, 1.0
        %v865 = vadd.f32 %v609, 1.0
        %v866 = vadd.f32 %v610, 1.0
        %v867 = vadd.f32 %v611, 1.0
        %v868 = vadd.f32 %v612, 1.0
        %v869 = vadd.f32 %v613, 1.0
        %v870 = vadd.f32 %v614, 1.0
        %v871 = vadd.f32 %v615, 1.0
        %v872 = vadd.f32 %v616, 1.0
        %v873 = vadd.f32 %v617, 1.0
        %v874 = vadd.f32 %v618, 1.0
        %v875 = vadd.f32 %v619, 1.0
        %v876 = vadd.f32 %v620, 1.0
        %v877 = vadd.f32 %v621, 1.0
        %v878 = vadd.f32 %v622, 1.0
        %v879 = vadd.f32 %v623, 1.0
        %v880 = vadd.f32 %v624, 1.0
        %v881 = vadd.f32 %v625, 1.0
        %v882 = vadd.f32 %v626, 1.0
        %v883 = vadd.f32 %v627, 1.0
        %v884 = vadd.f32 %v628, 1.0
        %v885 = vadd.f32 %v629, 1.0
        %v886 = vadd.f32 %v630, 1.0
        %v887 = vadd.f32 %v631, 1.0
        %v888 = vadd.f32 %v632, 1.0
        %v889 = vadd.f32 %v633, 1.0
        %v890 = vadd.f32 %v634, 1.0
        %v891 = vadd.f32 %v635, 1.0
        %v892 = vadd.f32 %v636, 1.0
        %v893 = vadd.f32 %v637, 1.0
        %v894 = vadd.f32 %v638, 1.0
        %v895 = vadd.f32 %v639, 1.0
        %v896 = vadd.f32 %v640, 1.0
        %v897 = vadd.f32 %v641, 1.0
        %v898 = vadd.f32 %v642, 1.0
        %v899 = vadd.f32 %v643, 1.0
        %v900 = vadd.f32 %v644, 1.0
        %v901 = vadd.f32 %v645, 1.0
        %v902 = vadd.f32 %v646, 1.0
        %v903 = vadd.f32 %v647, 1.0
        %v904 = vadd.f32 %v648, 1.0
        %v905 = vadd.f32 %v649, 1.0
        %v906 = vadd.f32 %v650, 1.0
        %v907 = vadd.f32 %v651, 1.0
        %v908 = vadd.f32 %v652, 1.0
        %v909 = vadd.f32 %v653, 1.0
        %v910 = vadd.f32 %v654, 1.0
        %v911 = vadd.f32 %v655, 1.0
        %v912 = vadd.f32 %v656, 1.0
        %v913 = vadd.f32 %v657, 1.0
        %v914 = vadd.f32 %v658, 1.0
        %v915 = vadd.f32 %v659, 1.0
        %v916 = vadd.f32 %v660, 1.0
        %v917 = vadd.f32 %v661, 1.0
        %v918 = vadd.f32 %v662, 1.0
        %v919 = vadd.f32 %v663, 1.0
        %v920 = vadd.f32 %v664, 1.0
        %v921 = vadd.f32 %v665, 1.0
        %v922 = vadd.f32 %v666, 1.0
        %v923 = vadd.f32 %v667, 1.0
        %v924 = vadd.f32 %v668, 1.0
        %v925 = vadd.f32 %v669, 1.0
        %926 = vst [vmem:[%s153] sm:$0xff] %v670
        %927 = vst [vmem:[%s153 + $0x8] sm:$0xff] %v671
        %928 = vst [vmem:[%s153 + $0x10] sm:$0xff] %v672
        %929 = vst [vmem:[%s153 + $0x18] sm:$0xff] %v673
        %930 = vst [vmem:[%s153 + $0x20] sm:$0xff] %v674
        %931 = vst [vmem:[%s153 + $0x28] sm:$0xff] %v675
        %932 = vst [vmem:[%s153 + $0x30] sm:$0xff] %v676
        %933 = vst [vmem:[%s153 + $0x38] sm:$0xff] %v677
        %934 = vst [vmem:[%s153 + $0x40] sm:$0xff] %v678
        %935 = vst [vmem:[%s153 + $0x48] sm:$0xff] %v679
        %936 = vst [vmem:[%s153 + $0x50] sm:$0xff] %v680
        %937 = vst [vmem:[%s153 + $0x58] sm:$0xff] %v681
        %938 = vst [vmem:[%s153 + $0x60] sm:$0xff] %v682
        %939 = vst [vmem:[%s153 + $0x68] sm:$0xff] %v683
        %940 = vst [vmem:[%s153 + $0x70] sm:$0xff] %v684
        %941 = vst [vmem:[%s153 + $0x78] sm:$0xff] %v685
        %942 = vst [vmem:[%s153 + $0x80] sm:$0xff] %v686
        %943 = vst [vmem:[%s153 + $0x88] sm:$0xff] %v687
        %944 = vst [vmem:[%s153 + $0x90] sm:$0xff] %v688
        %945 = vst [vmem:[%s153 + $0x98] sm:$0xff] %v689
        %946 = vst [vmem:[%s153 + $0xa0] sm:$0xff] %v690
        %947 = vst [vmem:[%s153 + $0xa8] sm:$0xff] %v691
        %948 = vst [vmem:[%s153 + $0xb0] sm:$0xff] %v692
        %949 = vst [vmem:[%s153 + $0xb8] sm:$0xff] %v693
        %950 = vst [vmem:[%s153 + $0xc0] sm:$0xff] %v694
        %951 = vst [vmem:[%s153 + $0xc8] sm:$0xff] %v695
        %952 = vst [vmem:[%s153 + $0xd0] sm:$0xff] %v696
        %953 = vst [vmem:[%s153 + $0xd8] sm:$0xff] %v697
        %954 = vst [vmem:[%s153 + $0xe0] sm:$0xff] %v698
        %955 = vst [vmem:[%s153 + $0xe8] sm:$0xff] %v699
        %956 = vst [vmem:[%s153 + $0xf0] sm:$0xff] %v700
        %957 = vst [vmem:[%s153 + $0xf8] sm:$0xff] %v701
        %958 = vst [vmem:[%s153 + $0x100] sm:$0xff] %v702
        %959 = vst [vmem:[%s153 + $0x108] sm:$0xff] %v703
        %960 = vst [vmem:[%s153 + $0x110] sm:$0xff] %v704
        %961 = vst [vmem:[%s153 + $0x118] sm:$0xff] %v705
        %962 = vst [vmem:[%s153 + $0x120] sm:$0xff] %v706
        %963 = vst [vmem:[%s153 + $0x128] sm:$0xff] %v707
        %964 = vst [vmem:[%s153 + $0x130] sm:$0xff] %v708
        %965 = vst [vmem:[%s153 + $0x138] sm:$0xff] %v709
        %966 = vst [vmem:[%s153 + $0x140] sm:$0xff] %v710
        %967 = vst [vmem:[%s153 + $0x148] sm:$0xff] %v711
        %968 = vst [vmem:[%s153 + $0x150] sm:$0xff] %v712
        %969 = vst [vmem:[%s153 + $0x158] sm:$0xff] %v713
        %970 = vst [vmem:[%s153 + $0x160] sm:$0xff] %v714
        %971 = vst [vmem:[%s153 + $0x168] sm:$0xff] %v715
        %972 = vst [vmem:[%s153 + $0x170] sm:$0xff] %v716
        %973 = vst [vmem:[%s153 + $0x178] sm:$0xff] %v717
        %974 = vst [vmem:[%s153 + $0x180] sm:$0xff] %v718
        %975 = vst [vmem:[%s153 + $0x188] sm:$0xff] %v719
        %976 = vst [vmem:[%s153 + $0x190] sm:$0xff] %v720
        %977 = vst [vmem:[%s153 + $0x198] sm:$0xff] %v721
        %978 = vst [vmem:[%s153 + $0x1a0] sm:$0xff] %v722
        %979 = vst [vmem:[%s153 + $0x1a8] sm:$0xff] %v723
        %980 = vst [vmem:[%s153 + $0x1b0] sm:$0xff] %v724
        %981 = vst [vmem:[%s153 + $0x1b8] sm:$0xff] %v725
        %982 = vst [vmem:[%s153 + $0x1c0] sm:$0xff] %v726
        %983 = vst [vmem:[%s153 + $0x1c8] sm:$0xff] %v727
        %984 = vst [vmem:[%s153 + $0x1d0] sm:$0xff] %v728
        %985 = vst [vmem:[%s153 + $0x1d8] sm:$0xff] %v729
        %986 = vst [vmem:[%s153 + $0x1e0] sm:$0xff] %v730
        %987 = vst [vmem:[%s153 + $0x1e8] sm:$0xff] %v731
        %988 = vst [vmem:[%s153 + $0x1f0] sm:$0xff] %v732
        %989 = vst [vmem:[%s153 + $0x1f8] sm:$0xff] %v733
        %990 = vst [vmem:[%s153 + $0x200] sm:$0xff] %v734
        %991 = vst [vmem:[%s153 + $0x208] sm:$0xff] %v735
        %992 = vst [vmem:[%s153 + $0x210] sm:$0xff] %v736
        %993 = vst [vmem:[%s153 + $0x218] sm:$0xff] %v737
        %994 = vst [vmem:[%s153 + $0x220] sm:$0xff] %v738
        %995 = vst [vmem:[%s153 + $0x228] sm:$0xff] %v739
        %996 = vst [vmem:[%s153 + $0x230] sm:$0xff] %v740
        %997 = vst [vmem:[%s153 + $0x238] sm:$0xff] %v741
        %998 = vst [vmem:[%s153 + $0x240] sm:$0xff] %v742
        %999 = vst [vmem:[%s153 + $0x248] sm:$0xff] %v743
        %1000 = vst [vmem:[%s153 + $0x250] sm:$0xff] %v744
        %1001 = vst [vmem:[%s153 + $0x258] sm:$0xff] %v745
        %1002 = vst [vmem:[%s153 + $0x260] sm:$0xff] %v746
        %1003 = vst [vmem:[%s153 + $0x268] sm:$0xff] %v747
        %1004 = vst [vmem:[%s153 + $0x270] sm:$0xff] %v748
        %1005 = vst [vmem:[%s153 + $0x278] sm:$0xff] %v749
        %1006 = vst [vmem:[%s153 + $0x280] sm:$0xff] %v750
        %1007 = vst [vmem:[%s153 + $0x288] sm:$0xff] %v751
        %1008 = vst [vmem:[%s153 + $0x290] sm:$0xff] %v752
        %1009 = vst [vmem:[%s153 + $0x298] sm:$0xff] %v753
        %1010 = vst [vmem:[%s153 + $0x2a0] sm:$0xff] %v754
        %1011 = vst [vmem:[%s153 + $0x2a8] sm:$0xff] %v755
        %1012 = vst [vmem:[%s153 + $0x2b0] sm:$0xff] %v756
        %1013 = vst [vmem:[%s153 + $0x2b8] sm:$0xff] %v757
        %1014 = vst [vmem:[%s153 + $0x2c0] sm:$0xff] %v758
        %1015 = vst [vmem:[%s153 + $0x2c8] sm:$0xff] %v759
        %1016 = vst [vmem:[%s153 + $0x2d0] sm:$0xff] %v760
        %1017 = vst [vmem:[%s153 + $0x2d8] sm:$0xff] %v761
        %1018 = vst [vmem:[%s153 + $0x2e0] sm:$0xff] %v762
        %1019 = vst [vmem:[%s153 + $0x2e8] sm:$0xff] %v763
        %1020 = vst [vmem:[%s153 + $0x2f0] sm:$0xff] %v764
        %1021 = vst [vmem:[%s153 + $0x2f8] sm:$0xff] %v765
        %1022 = vst [vmem:[%s153 + $0x300] sm:$0xff] %v766
        %1023 = vst [vmem:[%s153 + $0x308] sm:$0xff] %v767
        %1024 = vst [vmem:[%s153 + $0x310] sm:$0xff] %v768
        %1025 = vst [vmem:[%s153 + $0x318] sm:$0xff] %v769
        %1026 = vst [vmem:[%s153 + $0x320] sm:$0xff] %v770
        %1027 = vst [vmem:[%s153 + $0x328] sm:$0xff] %v771
        %1028 = vst [vmem:[%s153 + $0x330] sm:$0xff] %v772
        %1029 = vst [vmem:[%s153 + $0x338] sm:$0xff] %v773
        %1030 = vst [vmem:[%s153 + $0x340] sm:$0xff] %v774
        %1031 = vst [vmem:[%s153 + $0x348] sm:$0xff] %v775
        %1032 = vst [vmem:[%s153 + $0x350] sm:$0xff] %v776
        %1033 = vst [vmem:[%s153 + $0x358] sm:$0xff] %v777
        %1034 = vst [vmem:[%s153 + $0x360] sm:$0xff] %v778
        %1035 = vst [vmem:[%s153 + $0x368] sm:$0xff] %v779
        %1036 = vst [vmem:[%s153 + $0x370] sm:$0xff] %v780
        %1037 = vst [vmem:[%s153 + $0x378] sm:$0xff] %v781
        %1038 = vst [vmem:[%s153 + $0x380] sm:$0xff] %v782
        %1039 = vst [vmem:[%s153 + $0x388] sm:$0xff] %v783
        %1040 = vst [vmem:[%s153 + $0x390] sm:$0xff] %v784
        %1041 = vst [vmem:[%s153 + $0x398] sm:$0xff] %v785
        %1042 = vst [vmem:[%s153 + $0x3a0] sm:$0xff] %v786
        %1043 = vst [vmem:[%s153 + $0x3a8] sm:$0xff] %v787
        %1044 = vst [vmem:[%s153 + $0x3b0] sm:$0xff] %v788
        %1045 = vst [vmem:[%s153 + $0x3b8] sm:$0xff] %v789
        %1046 = vst [vmem:[%s153 + $0x3c0] sm:$0xff] %v790
        %1047 = vst [vmem:[%s153 + $0x3c8] sm:$0xff] %v791
        %1048 = vst [vmem:[%s153 + $0x3d0] sm:$0xff] %v792
        %1049 = vst [vmem:[%s153 + $0x3d8] sm:$0xff] %v793
        %1050 = vst [vmem:[%s153 + $0x3e0] sm:$0xff] %v794
        %1051 = vst [vmem:[%s153 + $0x3e8] sm:$0xff] %v795
        %1052 = vst [vmem:[%s153 + $0x3f0] sm:$0xff] %v796
        %1053 = vst [vmem:[%s153 + $0x3f8] sm:$0xff] %v797
        %1054 = vst [vmem:[%s153 + $0x400] sm:$0xff] %v798
        %1055 = vst [vmem:[%s153 + $0x408] sm:$0xff] %v799
        %1056 = vst [vmem:[%s153 + $0x410] sm:$0xff] %v800
        %1057 = vst [vmem:[%s153 + $0x418] sm:$0xff] %v801
        %1058 = vst [vmem:[%s153 + $0x420] sm:$0xff] %v802
        %1059 = vst [vmem:[%s153 + $0x428] sm:$0xff] %v803
        %1060 = vst [vmem:[%s153 + $0x430] sm:$0xff] %v804
        %1061 = vst [vmem:[%s153 + $0x438] sm:$0xff] %v805
        %1062 = vst [vmem:[%s153 + $0x440] sm:$0xff] %v806
        %1063 = vst [vmem:[%s153 + $0x448] sm:$0xff] %v807
        %1064 = vst [vmem:[%s153 + $0x450] sm:$0xff] %v808
        %1065 = vst [vmem:[%s153 + $0x458] sm:$0xff] %v809
        %1066 = vst [vmem:[%s153 + $0x460] sm:$0xff] %v810
        %1067 = vst [vmem:[%s153 + $0x468] sm:$0xff] %v811
        %1068 = vst [vmem:[%s153 + $0x470] sm:$0xff] %v812
        %1069 = vst [vmem:[%s153 + $0x478] sm:$0xff] %v813
        %1070 = vst [vmem:[%s153 + $0x480] sm:$0xff] %v814
        %1071 = vst [vmem:[%s153 + $0x488] sm:$0xff] %v815
        %1072 = vst [vmem:[%s153 + $0x490] sm:$0xff] %v816
        %1073 = vst [vmem:[%s153 + $0x498] sm:$0xff] %v817
        %1074 = vst [vmem:[%s153 + $0x4a0] sm:$0xff] %v818
        %1075 = vst [vmem:[%s153 + $0x4a8] sm:$0xff] %v819
        %1076 = vst [vmem:[%s153 + $0x4b0] sm:$0xff] %v820
        %1077 = vst [vmem:[%s153 + $0x4b8] sm:$0xff] %v821
        %1078 = vst [vmem:[%s153 + $0x4c0] sm:$0xff] %v822
        %1079 = vst [vmem:[%s153 + $0x4c8] sm:$0xff] %v823
        %1080 = vst [vmem:[%s153 + $0x4d0] sm:$0xff] %v824
        %1081 = vst [vmem:[%s153 + $0x4d8] sm:$0xff] %v825
        %1082 = vst [vmem:[%s153 + $0x4e0] sm:$0xff] %v826
        %1083 = vst [vmem:[%s153 + $0x4e8] sm:$0xff] %v827
        %1084 = vst [vmem:[%s153 + $0x4f0] sm:$0xff] %v828
        %1085 = vst [vmem:[%s153 + $0x4f8] sm:$0xff] %v829
        %1086 = vst [vmem:[%s153 + $0x500] sm:$0xff] %v830
        %1087 = vst [vmem:[%s153 + $0x508] sm:$0xff] %v831
        %1088 = vst [vmem:[%s153 + $0x510] sm:$0xff] %v832
        %1089 = vst [vmem:[%s153 + $0x518] sm:$0xff] %v833
        %1090 = vst [vmem:[%s153 + $0x520] sm:$0xff] %v834
        %1091 = vst [vmem:[%s153 + $0x528] sm:$0xff] %v835
        %1092 = vst [vmem:[%s153 + $0x530] sm:$0xff] %v836
        %1093 = vst [vmem:[%s153 + $0x538] sm:$0xff] %v837
        %1094 = vst [vmem:[%s153 + $0x540] sm:$0xff] %v838
        %1095 = vst [vmem:[%s153 + $0x548] sm:$0xff] %v839
        %1096 = vst [vmem:[%s153 + $0x550] sm:$0xff] %v840
        %1097 = vst [vmem:[%s153 + $0x558] sm:$0xff] %v841
        %1098 = vst [vmem:[%s153 + $0x560] sm:$0xff] %v842
        %1099 = vst [vmem:[%s153 + $0x568] sm:$0xff] %v843
        %1100 = vst [vmem:[%s153 + $0x570] sm:$0xff] %v844
        %1101 = vst [vmem:[%s153 + $0x578] sm:$0xff] %v845
        %1102 = vst [vmem:[%s153 + $0x580] sm:$0xff] %v846
        %1103 = vst [vmem:[%s153 + $0x588] sm:$0xff] %v847
        %1104 = vst [vmem:[%s153 + $0x590] sm:$0xff] %v848
        %1105 = vst [vmem:[%s153 + $0x598] sm:$0xff] %v849
        %1106 = vst [vmem:[%s153 + $0x5a0] sm:$0xff] %v850
        %1107 = vst [vmem:[%s153 + $0x5a8] sm:$0xff] %v851
        %1108 = vst [vmem:[%s153 + $0x5b0] sm:$0xff] %v852
        %1109 = vst [vmem:[%s153 + $0x5b8] sm:$0xff] %v853
        %1110 = vst [vmem:[%s153 + $0x5c0] sm:$0xff] %v854
        %1111 = vst [vmem:[%s153 + $0x5c8] sm:$0xff] %v855
        %1112 = vst [vmem:[%s153 + $0x5d0] sm:$0xff] %v856
        %1113 = vst [vmem:[%s153 + $0x5d8] sm:$0xff] %v857
        %1114 = vst [vmem:[%s153 + $0x5e0] sm:$0xff] %v858
        %1115 = vst [vmem:[%s153 + $0x5e8] sm:$0xff] %v859
        %1116 = vst [vmem:[%s153 + $0x5f0] sm:$0xff] %v860
        %1117 = vst [vmem:[%s153 + $0x5f8] sm:$0xff] %v861
        %1118 = vst [vmem:[%s153 + $0x600] sm:$0xff] %v862
        %1119 = vst [vmem:[%s153 + $0x608] sm:$0xff] %v863
        %1120 = vst [vmem:[%s153 + $0x610] sm:$0xff] %v864
        %1121 = vst [vmem:[%s153 + $0x618] sm:$0xff] %v865
        %1122 = vst [vmem:[%s153 + $0x620] sm:$0xff] %v866
        %1123 = vst [vmem:[%s153 + $0x628] sm:$0xff] %v867
        %1124 = vst [vmem:[%s153 + $0x630] sm:$0xff] %v868
        %1125 = vst [vmem:[%s153 + $0x638] sm:$0xff] %v869
        %1126 = vst [vmem:[%s153 + $0x640] sm:$0xff] %v870
        %1127 = vst [vmem:[%s153 + $0x648] sm:$0xff] %v871
        %1128 = vst [vmem:[%s153 + $0x650] sm:$0xff] %v872
        %1129 = vst [vmem:[%s153 + $0x658] sm:$0xff] %v873
        %1130 = vst [vmem:[%s153 + $0x660] sm:$0xff] %v874
        %1131 = vst [vmem:[%s153 + $0x668] sm:$0xff] %v875
        %1132 = vst [vmem:[%s153 + $0x670] sm:$0xff] %v876
        %1133 = vst [vmem:[%s153 + $0x678] sm:$0xff] %v877
        %1134 = vst [vmem:[%s153 + $0x680] sm:$0xff] %v878
        %1135 = vst [vmem:[%s153 + $0x688] sm:$0xff] %v879
        %1136 = vst [vmem:[%s153 + $0x690] sm:$0xff] %v880
        %1137 = vst [vmem:[%s153 + $0x698] sm:$0xff] %v881
        %1138 = vst [vmem:[%s153 + $0x6a0] sm:$0xff] %v882
        %1139 = vst [vmem:[%s153 + $0x6a8] sm:$0xff] %v883
        %1140 = vst [vmem:[%s153 + $0x6b0] sm:$0xff] %v884
        %1141 = vst [vmem:[%s153 + $0x6b8] sm:$0xff] %v885
        %1142 = vst [vmem:[%s153 + $0x6c0] sm:$0xff] %v886
        %1143 = vst [vmem:[%s153 + $0x6c8] sm:$0xff] %v887
        %1144 = vst [vmem:[%s153 + $0x6d0] sm:$0xff] %v888
        %1145 = vst [vmem:[%s153 + $0x6d8] sm:$0xff] %v889
        %1146 = vst [vmem:[%s153 + $0x6e0] sm:$0xff] %v890
        %1147 = vst [vmem:[%s153 + $0x6e8] sm:$0xff] %v891
        %1148 = vst [vmem:[%s153 + $0x6f0] sm:$0xff] %v892
        %1149 = vst [vmem:[%s153 + $0x6f8] sm:$0xff] %v893
        %1150 = vst [vmem:[%s153 + $0x700] sm:$0xff] %v894
        %1151 = vst [vmem:[%s153 + $0x708] sm:$0xff] %v895
        %1152 = vst [vmem:[%s153 + $0x710] sm:$0xff] %v896
        %1153 = vst [vmem:[%s153 + $0x718] sm:$0xff] %v897
        %1154 = vst [vmem:[%s153 + $0x720] sm:$0xff] %v898
        %1155 = vst [vmem:[%s153 + $0x728] sm:$0xff] %v899
        %1156 = vst [vmem:[%s153 + $0x730] sm:$0xff] %v900
        %1157 = vst [vmem:[%s153 + $0x738] sm:$0xff] %v901
        %1158 = vst [vmem:[%s153 + $0x740] sm:$0xff] %v902
        %1159 = vst [vmem:[%s153 + $0x748] sm:$0xff] %v903
        %1160 = vst [vmem:[%s153 + $0x750] sm:$0xff] %v904
        %1161 = vst [vmem:[%s153 + $0x758] sm:$0xff] %v905
        %1162 = vst [vmem:[%s153 + $0x760] sm:$0xff] %v906
        %1163 = vst [vmem:[%s153 + $0x768] sm:$0xff] %v907
        %1164 = vst [vmem:[%s153 + $0x770] sm:$0xff] %v908
        %1165 = vst [vmem:[%s153 + $0x778] sm:$0xff] %v909
        %1166 = vst [vmem:[%s153 + $0x780] sm:$0xff] %v910
        %1167 = vst [vmem:[%s153 + $0x788] sm:$0xff] %v911
        %1168 = vst [vmem:[%s153 + $0x790] sm:$0xff] %v912
        %1169 = vst [vmem:[%s153 + $0x798] sm:$0xff] %v913
        %1170 = vst [vmem:[%s153 + $0x7a0] sm:$0xff] %v914
        %1171 = vst [vmem:[%s153 + $0x7a8] sm:$0xff] %v915
        %1172 = vst [vmem:[%s153 + $0x7b0] sm:$0xff] %v916
        %1173 = vst [vmem:[%s153 + $0x7b8] sm:$0xff] %v917
        %1174 = vst [vmem:[%s153 + $0x7c0] sm:$0xff] %v918
        %1175 = vst [vmem:[%s153 + $0x7c8] sm:$0xff] %v919
        %1176 = vst [vmem:[%s153 + $0x7d0] sm:$0xff] %v920
        %1177 = vst [vmem:[%s153 + $0x7d8] sm:$0xff] %v921
        %1178 = vst [vmem:[%s153 + $0x7e0] sm:$0xff] %v922
        %1179 = vst [vmem:[%s153 + $0x7e8] sm:$0xff] %v923
        %1180 = vst [vmem:[%s153 + $0x7f0] sm:$0xff] %v924
        %1181 = vst [vmem:[%s153 + $0x7f8] sm:$0xff] %v925
        %s1182 = sand.u32 %s68, 1
        %s1183 = scalar_lea.sflag [#allocation4], %s1182
        %s1184 = sand.u32 %s68, 1
        %s1185 = smul.addr %s1184, 2048
        %s1186 = scalar_lea.vmem [#allocation5], %s1185
        // Predicated region
        $region29: #{_pallas_scale_bias.1} parent=23 // pred_check
          %p1187 = pneg %p78
        $region30: #{_pallas_scale_bias.1} parent=23 // pred_check_branch
          %1189 = sbr.rel (%p1187) target = $region32
        $region31: #{_pallas_scale_bias.1} parent=23 // pred_region
          %s1190 = smul.u32 64, %s22
          %s1191 = smul.u32 4, %s23
          %s1193 = ssub.s32 32768, 32768
          %1194 = vsyncadd %s1183, %s1193
          %s1195 = smul.addr %s1190, 8
          %s1196 = sadd.s32 %s1191, %s1195
          %s1197 = smul.addr %s1196, 128
          %s1198 = scalar_lea.hbm %s1, %s1197
          %s1199 = sshll.u32 %s1186, 4
          %s1200 = int_to_ptr.vmem [resolvable:$true] %s1199
          %1205 = dma.vmem_to_hbm [thread:$0]  %s1200, 32768, %s1198, %s1183, 512, 1024, 32
        $region32: #{_pallas_scale_bias.1} parent=23 // pred_fallthru
          _
      $region24: #{_pallas_scale_bias.1} parent=5 // pred_fallthru
        _
      %p1206 = scmp.le.s32.totalorder 2, %s13
      // Predicated region
      $region33: #{_pallas_scale_bias.1} parent=5 // pred_check
        %p1207 = pneg %p1206
      $region34: #{_pallas_scale_bias.1} parent=5 // pred_check_branch
        %1209 = sbr.rel (%p1207) target = $region36
      $region35: #{_pallas_scale_bias.1} parent=5 // pred_region
        %s1210 = ssub.s32 %s13, 2
        // Predicated region
        $region37: #{_pallas_scale_bias.1} parent=35 // pred_check
          %p1211 = pneg %p84
        $region38: #{_pallas_scale_bias.1} parent=35 // pred_check_branch
          %1213 = sbr.rel (%p1211) target = $region40
        $region39: #{_pallas_scale_bias.1} parent=35 // pred_region
          %s1214 = sand.u32 %s69, 1
          %s1215 = scalar_lea.sflag [#allocation4], %s1214
          %s1216 = sand.u32 %s69, 1
          %s1217 = smul.addr %s1216, 2048
          %s1218 = scalar_lea.vmem [#allocation5], %s1217
          %1219 = dma.done %s1215, 32768
        $region40: #{_pallas_scale_bias.1} parent=35 // pred_fallthru
          _
      $region36: #{_pallas_scale_bias.1} parent=5 // pred_fallthru
        _
    $region6: #{_pallas_scale_bias.1} parent=1 // loop_footer
      %s17 = sadd.s32 1, %s13
    $region7: #{_pallas_scale_bias.1} parent=1 // loop_footer_branch
      %12 = sbr.rel target = $region3
    $region8: #{_pallas_scale_bias.1} parent=1 // loop_exit
      _
    %1220 = vsyncpa [#allocation3], 1
    %s1221 = scalar_lea.sflag [#allocation3], 1
    %1222 = vsyncpa %s1221, 1
    %1223 = vsyncpa [#allocation4], 1
    %s1224 = scalar_lea.sflag [#allocation4], 1
    %1225 = vsyncpa %s1224, 1

</llo_original>
